<compile_context>
chip_gen: v7x
topology: tpu7x:2x2x1
jax: 0.10.0
libtpu: 0.0.40
codegen_flags: <defaults>
</compile_context>

<pallas_src>
import dataclasses
import math

import jax
import jax.numpy as jnp
from jax import lax
from jax.experimental import pallas as pl
from jax.experimental.pallas import tpu as pltpu


_INV_SQRT2 = 1.0 / math.sqrt(2.0)


def _round_up(x, mult):
    return (x + mult - 1) // mult * mult


def _cdiv(a, b):
    return (a + b - 1) // b


def _default_tiles_and_vmem():
    """Pick tile sizes / VMEM budget per TPU generation.

    v5e/v6e have 128 MiB VMEM per TensorCore -> big tiles, 96 MiB scoped limit.
    v7x has only 64 MiB per TC (and 3.2 TB/s HBM, so it needs less tile growth)
    -> conservative tiles, 48 MiB limit.  Unknown hardware falls back to the
    conservative config.
    """
    vmem_bytes = 64 * 1024 * 1024
    try:
        vmem_bytes = pltpu.get_tpu_info().vmem_capacity_bytes
    except Exception:
        pass
    if vmem_bytes >= 100 * 1024 * 1024:     # v5e / v6e
        return dict(tile_m=1024, tile_n=512, tile_k=2048,
                    vmem_limit_bytes=96 * 1024 * 1024)
    return dict(tile_m=512, tile_n=256, tile_k=2048,   # v7x / unknown
                vmem_limit_bytes=48 * 1024 * 1024)


_TILE_CFG = _default_tiles_and_vmem()


def _geglu_kernel(x_ref, w1_ref, w2_ref, b1_ref, b2_ref, o_ref,
                  acc1_ref, acc2_ref):
    # x_ref : (TM, TK)   activations tile (compute dtype)
    # w1_ref: (TK, TN)   first-half projection weight tile
    # w2_ref: (TK, TN)   second-half projection weight tile
    # b1_ref: (1, TN)    first-half bias tile (f32)
    # b2_ref: (1, TN)    second-half bias tile (f32)
    # o_ref : (TM, TN)   output tile
    # acc*_ref: (TM, TN) f32 accumulators (persist across the K grid axis)
    k = pl.program_id(2)

    x = x_ref[...]
    p1 = jnp.dot(x, w1_ref[...], preferred_element_type=jnp.float32)
    p2 = jnp.dot(x, w2_ref[...], preferred_element_type=jnp.float32)

    @pl.when(k == 0)
    def _():
        acc1_ref[...] = p1
        acc2_ref[...] = p2

    @pl.when(k != 0)
    def _():
        acc1_ref[...] += p1
        acc2_ref[...] += p2

    @pl.when(k == pl.num_programs(2) - 1)
    def _():
        h1 = acc1_ref[...] + b1_ref[...]
        h2 = acc2_ref[...] + b2_ref[...]
        # Exact (erf-based) GELU in f32, matching torch.nn.functional.gelu default.
        gelu_h2 = 0.5 * h2 * (1.0 + lax.erf(h2 * _INV_SQRT2))
        o_ref[...] = (h1 * gelu_h2).astype(o_ref.dtype)


@dataclasses.dataclass(frozen=True)
class GEGLUParams:
    """Pre-split / pre-padded / pre-cast GEGLU projection parameters."""
    w1: jax.Array          # (k_pad, n_pad) compute dtype
    w2: jax.Array          # (k_pad, n_pad) compute dtype
    b1: jax.Array          # (1, n_pad)     float32
    b2: jax.Array          # (1, n_pad)     float32
    in_features: int
    out_features: int
    tn: int
    tk: int


def pack_geglu_params(w, b, out_features, *, tile_n=None, tile_k=None,
                      compute_dtype=jnp.bfloat16):
    """One-time (init-time) weight packing -- keep this OUT of the hot path.

    w: (in_features, 2*out_features)  (transposed PyTorch Linear weight)
    b: (2*out_features,)
    """
    tile_n = _TILE_CFG["tile_n"] if tile_n is None else tile_n
    tile_k = _TILE_CFG["tile_k"] if tile_k is None else tile_k

    in_features = w.shape[0]
    assert w.shape == (in_features, 2 * out_features)
    assert b.shape == (2 * out_features,)

    tn = min(tile_n, _round_up(out_features, 128))
    tk = min(tile_k, _round_up(in_features, 128))
    n_pad = _round_up(out_features, tn)
    k_pad = _round_up(in_features, tk)

    w1 = w[:, :out_features]
    w2 = w[:, out_features:]
    if k_pad != in_features or n_pad != out_features:
        w1 = jnp.pad(w1, ((0, k_pad - in_features), (0, n_pad - out_features)))
        w2 = jnp.pad(w2, ((0, k_pad - in_features), (0, n_pad - out_features)))
    w1 = w1.astype(compute_dtype)
    w2 = w2.astype(compute_dtype)

    b1 = b[:out_features].astype(jnp.float32).reshape(1, out_features)
    b2 = b[out_features:].astype(jnp.float32).reshape(1, out_features)
    if n_pad != out_features:
        b1 = jnp.pad(b1, ((0, 0), (0, n_pad - out_features)))
        b2 = jnp.pad(b2, ((0, 0), (0, n_pad - out_features)))

    return GEGLUParams(w1=w1, w2=w2, b1=b1, b2=b2,
                       in_features=in_features, out_features=out_features,
                       tn=tn, tk=tk)


def geglu_pallas(x, params: GEGLUParams, *, tile_m=None, vmem_limit_bytes=None):
    """GEGLU forward: x1 * gelu(x2) where [x1|x2] = x @ W + b.

    x: (..., in_features); returns (..., out_features) in x.dtype.
    """
    tile_m = _TILE_CFG["tile_m"] if tile_m is None else tile_m
    vmem_limit_bytes = (_TILE_CFG["vmem_limit_bytes"]
                        if vmem_limit_bytes is None else vmem_limit_bytes)

    in_features = x.shape[-1]
    assert in_features == params.in_features
    out_features = params.out_features
    lead_shape = x.shape[:-1]
    m = math.prod(lead_shape) if lead_shape else 1

    compute_dtype = params.w1.dtype
    sublane = 16 if compute_dtype == jnp.bfloat16 else 8

    tn, tk = params.tn, params.tk
    k_pad, n_pad = params.w1.shape
    grid_n = n_pad // tn

    # MXU/(8,128)-aligned M tile, clamped to the (padded) problem size.
    tm = min(tile_m, _round_up(m, sublane))
    # Guarantee >= 2 output blocks when the problem allows, so v7x's two
    # TensorCores (and megacore sharding on the "parallel" axes) both get work.
    if grid_n * _cdiv(m, tm) <= 1 and m > sublane:
        tm = _round_up(_cdiv(m, 2), sublane)
    m_pad = _round_up(m, tm)
    grid = (m_pad // tm, grid_n, k_pad // tk)

    # Per-call activation prep (cast to compute dtype; pad M/K if needed).
    x2d = x.reshape(m, in_features).astype(compute_dtype)
    if m_pad != m or k_pad != in_features:
        x2d = jnp.pad(x2d, ((0, m_pad - m), (0, k_pad - in_features)))

    in_isize = jnp.dtype(compute_dtype).itemsize
    out_isize = jnp.dtype(x.dtype).itemsize
    cost = pl.CostEstimate(
        flops=4 * m * in_features * out_features,        # 2*M*K*(2N)
        transcendentals=m * out_features,                # one erf per output elem
        bytes_accessed=(m * in_features * in_isize
                        + 2 * in_features * out_features * in_isize
                        + 2 * out_features * 4
                        + m * out_features * out_isize),
    )

    out = pl.pallas_call(
        _geglu_kernel,
        out_shape=jax.ShapeDtypeStruct((m_pad, n_pad), x.dtype),
        grid_spec=pltpu.PrefetchScalarGridSpec(
            num_scalar_prefetch=0,
            grid=grid,
            in_specs=[
                pl.BlockSpec((tm, tk), lambda i, j, k: (i, k)),   # x
                pl.BlockSpec((tk, tn), lambda i, j, k: (k, j)),   # W1
                pl.BlockSpec((tk, tn), lambda i, j, k: (k, j)),   # W2
                pl.BlockSpec((1, tn), lambda i, j, k: (0, j)),    # b1
                pl.BlockSpec((1, tn), lambda i, j, k: (0, j)),    # b2
            ],
            out_specs=pl.BlockSpec((tm, tn), lambda i, j, k: (i, j)),
            scratch_shapes=[
                pltpu.VMEM((tm, tn), jnp.float32),
                pltpu.VMEM((tm, tn), jnp.float32),
            ],
        ),
        compiler_params=pltpu.CompilerParams(
            dimension_semantics=("parallel", "parallel", "arbitrary"),
            vmem_limit_bytes=vmem_limit_bytes,
        ),
        cost_estimate=cost,
    )(x2d, params.w1, params.w2, params.b1, params.b2)

    out = out[:m, :out_features]
    return out.reshape(*lead_shape, out_features)


def geglu_reference(x, w, b, out_features):
    proj = jnp.einsum("...k,kn->...n", x, w,
                      preferred_element_type=jnp.float32) + b
    x1 = proj[..., :out_features]
    x2 = proj[..., out_features:]
    gelu_x2 = 0.5 * x2 * (1.0 + lax.erf(x2 * _INV_SQRT2))
    return (x1 * gelu_x2).astype(x.dtype)


if __name__ == "__main__":
    # Small shapes: batch=2, seq=8, in_features=32, out_features=64.
    batch, seq, in_features, out_features = 2, 8, 32, 64

    key = jax.random.PRNGKey(0)
    kx, kw, kb = jax.random.split(key, 3)

    x = jax.random.normal(kx, (batch, seq, in_features), dtype=jnp.float32)

    # Deterministic init mimicking nn.Linear defaults (uniform +/- 1/sqrt(fan_in)).
    bound = 1.0 / math.sqrt(in_features)
    # PyTorch weight is (2*out, in); we store the transpose (in, 2*out).
    w = jax.random.uniform(
        kw, (in_features, 2 * out_features), minval=-bound, maxval=bound,
        dtype=jnp.float32)
    b = jax.random.uniform(
        kb, (2 * out_features,), minval=-bound, maxval=bound, dtype=jnp.float32)

    ref = geglu_reference(x, w, b, out_features)

    # Exact f32 MXU path: matches the torch default (erf GELU) reference tightly.
    params_f32 = pack_geglu_params(w, b, out_features, compute_dtype=jnp.float32)
    out_f32 = jax.block_until_ready(geglu_pallas(x, params_f32))
    assert out_f32.shape == (batch, seq, out_features)
    assert jnp.allclose(out_f32, ref, atol=1e-5, rtol=1e-5), "f32 path mismatch"

    # bf16 MXU path (production default): bf16 inputs/weights, f32 accumulation
    # and f32 bias+GELU epilogue -> error bounded at bf16 input-rounding level.
    params_bf16 = pack_geglu_params(w, b, out_features, compute_dtype=jnp.bfloat16)
    out_bf16 = jax.block_until_ready(geglu_pallas(x, params_bf16))
    assert out_bf16.shape == (batch, seq, out_features)
    assert jnp.allclose(out_bf16, ref, atol=2e-2, rtol=2e-2), "bf16 path mismatch"

    print("KERNEL_OK")
</pallas_src>

<mosaic_0001>
module attributes {stable_mosaic.version = 11 : i64} {
  func.func @_geglu_kernel(%arg0: i32, %arg1: i32, %arg2: i32, %arg3: memref<8x128xf32, #tpu.memory_space<vmem>>, %arg4: memref<128x128xf32, #tpu.memory_space<vmem>>, %arg5: memref<128x128xf32, #tpu.memory_space<vmem>>, %arg6: memref<1x128xf32, #tpu.memory_space<vmem>>, %arg7: memref<1x128xf32, #tpu.memory_space<vmem>>, %arg8: memref<8x128xf32, #tpu.memory_space<vmem>>, %arg9: memref<8x128xf32, #tpu.memory_space<vmem>>, %arg10: memref<8x128xf32, #tpu.memory_space<vmem>>) attributes {dimension_semantics = [#tpu.dimension_semantics<parallel>, #tpu.dimension_semantics<parallel>, #tpu.dimension_semantics<arbitrary>], iteration_bounds = array<i64: 2, 1, 1>, scalar_prefetch = 0 : i64, scratch_operands = 2 : i64, tpu.core_type = #tpu.core_type<tc>, window_params = [{transform_indices = @transform_0, window_bounds = array<i64: 8, 128>}, {transform_indices = @transform_1, window_bounds = array<i64: 128, 128>}, {transform_indices = @transform_2, window_bounds = array<i64: 128, 128>}, {transform_indices = @transform_3, window_bounds = array<i64: 1, 128>}, {transform_indices = @transform_4, window_bounds = array<i64: 1, 128>}, {transform_indices = @transform_5, window_bounds = array<i64: 8, 128>}]} {
    %c0 = arith.constant 0 : index
    %c0_0 = arith.constant 0 : index
    %0 = vector.load %arg3[%c0, %c0_0] : memref<8x128xf32, #tpu.memory_space<vmem>>, vector<8x128xf32>
    %c0_1 = arith.constant 0 : index
    %c0_2 = arith.constant 0 : index
    %1 = vector.load %arg4[%c0_1, %c0_2] : memref<128x128xf32, #tpu.memory_space<vmem>>, vector<128x128xf32>
    %cst = arith.constant dense<0.000000e+00> : vector<8x128xf32>
    %2 = tpu.matmul %0, %1, %cst {dimension_numbers = #tpu.dot_dimension_numbers<[1], [0], [0], [1], [0, 0, 1, 1], [], []>} : vector<8x128xf32>, vector<128x128xf32>, vector<8x128xf32> -> vector<8x128xf32>
    %c0_3 = arith.constant 0 : index
    %c0_4 = arith.constant 0 : index
    %3 = vector.load %arg5[%c0_3, %c0_4] : memref<128x128xf32, #tpu.memory_space<vmem>>, vector<128x128xf32>
    %cst_5 = arith.constant dense<0.000000e+00> : vector<8x128xf32>
    %4 = tpu.matmul %0, %3, %cst_5 {dimension_numbers = #tpu.dot_dimension_numbers<[1], [0], [0], [1], [0, 0, 1, 1], [], []>} : vector<8x128xf32>, vector<128x128xf32>, vector<8x128xf32> -> vector<8x128xf32>
    %c0_i32 = arith.constant 0 : i32
    %5 = arith.cmpi eq, %arg2, %c0_i32 : i32
    %6 = arith.extui %5 : i1 to i32
    %c0_i32_6 = arith.constant 0 : i32
    %7 = arith.cmpi ne, %6, %c0_i32_6 : i32
    scf.if %7 {
      %c0_11 = arith.constant 0 : index
      %c0_12 = arith.constant 0 : index
      %14 = vector.load %arg9[%c0_11, %c0_12] : memref<8x128xf32, #tpu.memory_space<vmem>>, vector<8x128xf32>
      tpu.vector_store %arg9[%c0_11, %c0_12], %2 {strides = array<i32>} : memref<8x128xf32, #tpu.memory_space<vmem>>, vector<8x128xf32>,
      %c0_13 = arith.constant 0 : index
      %c0_14 = arith.constant 0 : index
      %15 = vector.load %arg10[%c0_13, %c0_14] : memref<8x128xf32, #tpu.memory_space<vmem>>, vector<8x128xf32>
      tpu.vector_store %arg10[%c0_13, %c0_14], %4 {strides = array<i32>} : memref<8x128xf32, #tpu.memory_space<vmem>>, vector<8x128xf32>,
    } else {
    }
    %c0_i32_7 = arith.constant 0 : i32
    %8 = arith.cmpi ne, %arg2, %c0_i32_7 : i32
    %9 = arith.extui %8 : i1 to i32
    %c0_i32_8 = arith.constant 0 : i32
    %10 = arith.cmpi ne, %9, %c0_i32_8 : i32
    scf.if %10 {
      %c0_11 = arith.constant 0 : index
      %c0_12 = arith.constant 0 : index
      %14 = vector.load %arg9[%c0_11, %c0_12] : memref<8x128xf32, #tpu.memory_space<vmem>>, vector<8x128xf32>
      %15 = arith.addf %14, %2 : vector<8x128xf32>
      %c0_13 = arith.constant 0 : index
      %c0_14 = arith.constant 0 : index
      %16 = vector.load %arg9[%c0_13, %c0_14] : memref<8x128xf32, #tpu.memory_space<vmem>>, vector<8x128xf32>
      tpu.vector_store %arg9[%c0_13, %c0_14], %15 {strides = array<i32>} : memref<8x128xf32, #tpu.memory_space<vmem>>, vector<8x128xf32>,
      %c0_15 = arith.constant 0 : index
      %c0_16 = arith.constant 0 : index
      %17 = vector.load %arg10[%c0_15, %c0_16] : memref<8x128xf32, #tpu.memory_space<vmem>>, vector<8x128xf32>
      %18 = arith.addf %17, %4 : vector<8x128xf32>
      %c0_17 = arith.constant 0 : index
      %c0_18 = arith.constant 0 : index
      %19 = vector.load %arg10[%c0_17, %c0_18] : memref<8x128xf32, #tpu.memory_space<vmem>>, vector<8x128xf32>
      tpu.vector_store %arg10[%c0_17, %c0_18], %18 {strides = array<i32>} : memref<8x128xf32, #tpu.memory_space<vmem>>, vector<8x128xf32>,
    } else {
    }
    %c0_i32_9 = arith.constant 0 : i32
    %11 = arith.cmpi eq, %arg2, %c0_i32_9 : i32
    %12 = arith.extui %11 : i1 to i32
    %c0_i32_10 = arith.constant 0 : i32
    %13 = arith.cmpi ne, %12, %c0_i32_10 : i32
    scf.if %13 {
      %c0_11 = arith.constant 0 : index
      %c0_12 = arith.constant 0 : index
      %14 = vector.load %arg9[%c0_11, %c0_12] : memref<8x128xf32, #tpu.memory_space<vmem>>, vector<8x128xf32>
      %c0_13 = arith.constant 0 : index
      %c0_14 = arith.constant 0 : index
      %15 = vector.load %arg6[%c0_13, %c0_14] : memref<1x128xf32, #tpu.memory_space<vmem>>, vector<1x128xf32>
      %16 = vector.broadcast %15 : vector<1x128xf32> to vector<8x128xf32>
      %17 = arith.addf %14, %16 : vector<8x128xf32>
      %c0_15 = arith.constant 0 : index
      %c0_16 = arith.constant 0 : index
      %18 = vector.load %arg10[%c0_15, %c0_16] : memref<8x128xf32, #tpu.memory_space<vmem>>, vector<8x128xf32>
      %c0_17 = arith.constant 0 : index
      %c0_18 = arith.constant 0 : index
      %19 = vector.load %arg7[%c0_17, %c0_18] : memref<1x128xf32, #tpu.memory_space<vmem>>, vector<1x128xf32>
      %20 = vector.broadcast %19 : vector<1x128xf32> to vector<8x128xf32>
      %21 = arith.addf %18, %20 : vector<8x128xf32>
      %cst_19 = arith.constant 5.000000e-01 : f32
      %22 = vector.broadcast %cst_19 : f32 to vector<8x128xf32>
      %23 = arith.mulf %22, %21 : vector<8x128xf32>
      %cst_20 = arith.constant 0.707106769 : f32
      %24 = vector.broadcast %cst_20 : f32 to vector<8x128xf32>
      %25 = arith.mulf %21, %24 : vector<8x128xf32>
      %26 = math.erf %25 : vector<8x128xf32>
      %cst_21 = arith.constant 1.000000e+00 : f32
      %27 = vector.broadcast %cst_21 : f32 to vector<8x128xf32>
      %28 = arith.addf %27, %26 : vector<8x128xf32>
      %29 = arith.mulf %23, %28 : vector<8x128xf32>
      %30 = arith.mulf %17, %29 : vector<8x128xf32>
      %c0_22 = arith.constant 0 : index
      %c0_23 = arith.constant 0 : index
      %31 = vector.load %arg8[%c0_22, %c0_23] : memref<8x128xf32, #tpu.memory_space<vmem>>, vector<8x128xf32>
      tpu.vector_store %arg8[%c0_22, %c0_23], %30 {strides = array<i32>} : memref<8x128xf32, #tpu.memory_space<vmem>>, vector<8x128xf32>,
    } else {
    }
    return
  }
  func.func @transform_0(%arg0: i32, %arg1: i32, %arg2: i32) -> (i32, i32) {
    %c0_i32 = arith.constant 0 : i32
    return %arg0, %arg2 : i32, i32
  }
  func.func @transform_1(%arg0: i32, %arg1: i32, %arg2: i32) -> (i32, i32) {
    %c0_i32 = arith.constant 0 : i32
    return %arg2, %arg1 : i32, i32
  }
  func.func @transform_2(%arg0: i32, %arg1: i32, %arg2: i32) -> (i32, i32) {
    %c0_i32 = arith.constant 0 : i32
    return %arg2, %arg1 : i32, i32
  }
  func.func @transform_3(%arg0: i32, %arg1: i32, %arg2: i32) -> (i32, i32) {
    %c0_i32 = arith.constant 0 : i32
    %c0_i32_0 = arith.constant 0 : i32
    return %c0_i32, %arg1 : i32, i32
  }
  func.func @transform_4(%arg0: i32, %arg1: i32, %arg2: i32) -> (i32, i32) {
    %c0_i32 = arith.constant 0 : i32
    %c0_i32_0 = arith.constant 0 : i32
    return %c0_i32, %arg1 : i32, i32
  }
  func.func @transform_5(%arg0: i32, %arg1: i32, %arg2: i32) -> (i32, i32) {
    %c0_i32 = arith.constant 0 : i32
    return %arg0, %arg1 : i32, i32
  }
}

</mosaic_0001>

<llo_original>
// kernel: tpu_custom_call.1
$region0: #{tpu_custom_call.1}
  #allocation0 [shape = 'u32[]', space=smem, size = 0x4, offset = 0x4, fixed_abs, tag = 'smem constant byte address 0x4 - core index']
  #allocation1 [shape = 'u32[144,128]{1,0:T(1,128)}', space=vmem, size = 0x12000, scoped, tag = 'internal scratch']
  #allocation2 [shape = 'f32[8,128]{1,0:T(8,128)}', space=vmem, size = 0x1000, scoped, tag = 'scratch operand']
  #allocation3 [shape = 'f32[8,128]{1,0:T(8,128)}', space=vmem, size = 0x1000, scoped, tag = 'scratch operand']
  %s0 = inlined_call_operand.hbm [shape: f32[16,128], index: 0, kind: input, shape index: {}]
  %s1 = inlined_call_operand.hbm [shape: f32[128,128], index: 1, kind: input, shape index: {}]
  %s2 = inlined_call_operand.hbm [shape: f32[128,128], index: 2, kind: input, shape index: {}]
  %s3 = inlined_call_operand.vmem [shape: f32[1,128], index: 3, kind: input, shape index: {}]
  %s4 = inlined_call_operand.vmem [shape: f32[1,128], index: 4, kind: input, shape index: {}]
  %s5 = inlined_call_operand.hbm [shape: f32[16,128], index: 5, kind: output, shape index: {}]
  %s6 = sld [smem:[#allocation0]]
  $region77: #{tpu_custom_call.1} parent=0
    _
  %s8 = ssub.s32 1, %s6
  %s9 = scalar_select 0, %s8, %s6
  $region1: #{tpu_custom_call.1} parent=0
    #allocation4 [shape = 'u8[8192]{0}', space=vmem, size = 0x2000, scoped, tag = 'input window, operand 0']
    #allocation5 [shape = 's32[2]{0}', space=sflag, size = 0x8, scoped, tag = 'scoped memory for tpu_custom_call.1']
    #allocation6 [shape = 's32[2]{0}', space=sflag, size = 0x8, scoped, tag = 'scoped memory for tpu_custom_call.1']
    #allocation7 [shape = 'u8[65536]{0}', space=vmem, size = 0x10000, scoped, tag = 'input window, operand 1, single buffered']
    #allocation8 [shape = 's32[1]{0}', space=sflag, size = 0x4, scoped, tag = 'scoped memory for tpu_custom_call.1']
    #allocation9 [shape = 'u8[65536]{0}', space=vmem, size = 0x10000, scoped, tag = 'input window, operand 2, single buffered']
    #allocation10 [shape = 'u8[8192]{0}', space=vmem, size = 0x2000, scoped, tag = 'output window, operand 0']
    %10 = vsyncpa [#allocation5], 0
    %s11 = scalar_lea.sflag [#allocation5], 1
    %12 = vsyncpa %s11, 0
    %13 = vsyncpa [#allocation8], 0
    %14 = vsyncpa [#allocation6], 0
    %s15 = scalar_lea.sflag [#allocation6], 1
    %16 = vsyncpa %s15, 0
    loop: start=0, step=1, limit=4
    $region2: #{tpu_custom_call.1} parent=1 // loop_pre_header
      _
    $region3: #{tpu_custom_call.1} parent=1 // loop_header
      %s18 = sphi 0, %s22
      %p19 = scmp.ge.s32.totalorder %s18, 4
      %s25 = sphi 0, %s44
      %s26 = sphi 0, %s40
      %s27 = sphi 0, %s36
      %s28 = sphi 0, %s25
      %s29 = sphi 0, %s26
      %s30 = sphi 0, %s27
      %s31 = sphi 0, %s28
      %s32 = sphi 0, %s29
      %s33 = sphi 0, %s30
      %s49 = sphi 0, %s51
      %s52 = sphi 0, %s49
      %s53 = sphi 0, %s52
      %s69 = sphi 0, %s53
      %s77 = sphi 0, %s79
      %s80 = sphi 0, %s77
      %s81 = sphi 0, %s80
      %s97 = sphi 0, %s81
      %s105 = sphi 0, %s107
      %s108 = sphi 0, %s105
      %s109 = sphi 0, %s108
      %s125 = sphi 0, %s109
      %s131 = sphi 0, %s133
      %s134 = sphi 0, %s131
      %s135 = sphi 0, %s134
      %s151 = sphi 0, %s135
      %s157 = sphi 0, %s159
      %s160 = sphi 0, %s157
      %s161 = sphi 0, %s160
      %s177 = sphi 0, %s161
      %s185 = sphi 0, %s187
      %s188 = sphi 0, %s185
      %s189 = sphi 0, %s188
      %s205 = sphi 0, %s189
    $region4: #{tpu_custom_call.1} parent=1 // loop_header_branch
      %21 = sbr.rel (%p19) target = $region8
    $region5: #{tpu_custom_call.1} parent=1 // loop_body
      %s23 = ssub.s32 %s18, 1
      %s24 = ssub.s32 %s18, 2
      %s34 = sadd.s32 1, %s27
      %p35 = scmp.ge.s32.totalorder %s34, 1
      %s36 = scalar_select %p35, 0, %s34
      %s37 = sadd.s32 1, %s26
      %s38 = scalar_select %p35, %s37, %s26
      %p39 = scmp.ge.s32.totalorder %s38, 1
      %s40 = scalar_select %p39, 0, %s38
      %s41 = sadd.s32 1, %s25
      %s42 = scalar_select %p39, %s41, %s25
      %p43 = scmp.ge.s32.totalorder %s42, 2
      %s44 = scalar_select %p43, 0, %s42
      %s45 = ssub.s32 %s25, %s44
      %s46 = ssub.s32 %s27, %s36
      %s47 = sor.u32 %s45, %s46
      %p48 = scmp.eq.s32.totalorder %s47, 0
      %s50 = sadd.s32 %s49, 1
      %s51 = scalar_select %p48, %s49, %s50
      %p54 = pneg %p48
      %p55 = scmp.eq.s32.totalorder %s18, 1
      %p56 = por %p54, %p55
      %p57 = scmp.ne.s32.totalorder %s49, %s52
      %p58 = scmp.eq.s32.totalorder %s18, 0
      %p59 = por %p57, %p58
      %p60 = scmp.ne.s32.totalorder %s49, %s52
      %p61 = scmp.eq.s32.totalorder %s23, 1
      %p62 = por %p60, %p61
      %p63 = scmp.ne.s32.totalorder %s52, %s53
      %p64 = scmp.eq.s32.totalorder %s23, 0
      %p65 = por %p63, %p64
      %p66 = scmp.ne.s32.totalorder %s52, %s53
      %p67 = scmp.eq.s32.totalorder %s24, 1
      %p68 = por %p66, %p67
      %p70 = scmp.ne.s32.totalorder %s53, %s69
      %p71 = scmp.eq.s32.totalorder %s24, 0
      %p72 = por %p70, %p71
      %s73 = ssub.s32 %s27, %s36
      %s74 = ssub.s32 %s26, %s40
      %s75 = sor.u32 %s73, %s74
      %p76 = scmp.eq.s32.totalorder %s75, 0
      %s78 = sadd.s32 %s77, 1
      %s79 = scalar_select %p76, %s77, %s78
      %p82 = pneg %p76
      %p83 = scmp.eq.s32.totalorder %s18, 1
      %p84 = por %p82, %p83
      %p85 = scmp.ne.s32.totalorder %s77, %s80
      %p86 = scmp.eq.s32.totalorder %s18, 0
      %p87 = por %p85, %p86
      %p88 = scmp.ne.s32.totalorder %s77, %s80
      %p89 = scmp.eq.s32.totalorder %s23, 1
      %p90 = por %p88, %p89
      %p91 = scmp.ne.s32.totalorder %s80, %s81
      %p92 = scmp.eq.s32.totalorder %s23, 0
      %p93 = por %p91, %p92
      %p94 = scmp.ne.s32.totalorder %s80, %s81
      %p95 = scmp.eq.s32.totalorder %s24, 1
      %p96 = por %p94, %p95
      %p98 = scmp.ne.s32.totalorder %s81, %s97
      %p99 = scmp.eq.s32.totalorder %s24, 0
      %p100 = por %p98, %p99
      %s101 = ssub.s32 %s27, %s36
      %s102 = ssub.s32 %s26, %s40
      %s103 = sor.u32 %s101, %s102
      %p104 = scmp.eq.s32.totalorder %s103, 0
      %s106 = sadd.s32 %s105, 1
      %s107 = scalar_select %p104, %s105, %s106
      %p110 = pneg %p104
      %p111 = scmp.eq.s32.totalorder %s18, 1
      %p112 = por %p110, %p111
      %p113 = scmp.ne.s32.totalorder %s105, %s108
      %p114 = scmp.eq.s32.totalorder %s18, 0
      %p115 = por %p113, %p114
      %p116 = scmp.ne.s32.totalorder %s105, %s108
      %p117 = scmp.eq.s32.totalorder %s23, 1
      %p118 = por %p116, %p117
      %p119 = scmp.ne.s32.totalorder %s108, %s109
      %p120 = scmp.eq.s32.totalorder %s23, 0
      %p121 = por %p119, %p120
      %p122 = scmp.ne.s32.totalorder %s108, %s109
      %p123 = scmp.eq.s32.totalorder %s24, 1
      %p124 = por %p122, %p123
      %p126 = scmp.ne.s32.totalorder %s109, %s125
      %p127 = scmp.eq.s32.totalorder %s24, 0
      %p128 = por %p126, %p127
      %s129 = ssub.s32 %s26, %s40
      %p130 = scmp.eq.s32.totalorder %s129, 0
      %s132 = sadd.s32 %s131, 1
      %s133 = scalar_select %p130, %s131, %s132
      %p136 = pneg %p130
      %p137 = scmp.eq.s32.totalorder %s18, 1
      %p138 = por %p136, %p137
      %p139 = scmp.ne.s32.totalorder %s131, %s134
      %p140 = scmp.eq.s32.totalorder %s18, 0
      %p141 = por %p139, %p140
      %p142 = scmp.ne.s32.totalorder %s131, %s134
      %p143 = scmp.eq.s32.totalorder %s23, 1
      %p144 = por %p142, %p143
      %p145 = scmp.ne.s32.totalorder %s134, %s135
      %p146 = scmp.eq.s32.totalorder %s23, 0
      %p147 = por %p145, %p146
      %p148 = scmp.ne.s32.totalorder %s134, %s135
      %p149 = scmp.eq.s32.totalorder %s24, 1
      %p150 = por %p148, %p149
      %p152 = scmp.ne.s32.totalorder %s135, %s151
      %p153 = scmp.eq.s32.totalorder %s24, 0
      %p154 = por %p152, %p153
      %s155 = ssub.s32 %s26, %s40
      %p156 = scmp.eq.s32.totalorder %s155, 0
      %s158 = sadd.s32 %s157, 1
      %s159 = scalar_select %p156, %s157, %s158
      %p162 = pneg %p156
      %p163 = scmp.eq.s32.totalorder %s18, 1
      %p164 = por %p162, %p163
      %p165 = scmp.ne.s32.totalorder %s157, %s160
      %p166 = scmp.eq.s32.totalorder %s18, 0
      %p167 = por %p165, %p166
      %p168 = scmp.ne.s32.totalorder %s157, %s160
      %p169 = scmp.eq.s32.totalorder %s23, 1
      %p170 = por %p168, %p169
      %p171 = scmp.ne.s32.totalorder %s160, %s161
      %p172 = scmp.eq.s32.totalorder %s23, 0
      %p173 = por %p171, %p172
      %p174 = scmp.ne.s32.totalorder %s160, %s161
      %p175 = scmp.eq.s32.totalorder %s24, 1
      %p176 = por %p174, %p175
      %p178 = scmp.ne.s32.totalorder %s161, %s177
      %p179 = scmp.eq.s32.totalorder %s24, 0
      %p180 = por %p178, %p179
      %s181 = ssub.s32 %s25, %s44
      %s182 = ssub.s32 %s26, %s40
      %s183 = sor.u32 %s181, %s182
      %p184 = scmp.eq.s32.totalorder %s183, 0
      %s186 = sadd.s32 %s185, 1
      %s187 = scalar_select %p184, %s185, %s186
      %p190 = pneg %p184
      %p191 = scmp.eq.s32.totalorder %s18, 1
      %p192 = por %p190, %p191
      %p193 = scmp.ne.s32.totalorder %s185, %s188
      %p194 = scmp.eq.s32.totalorder %s18, 0
      %p195 = por %p193, %p194
      %p196 = scmp.ne.s32.totalorder %s185, %s188
      %p197 = scmp.eq.s32.totalorder %s23, 1
      %p198 = por %p196, %p197
      %p199 = scmp.ne.s32.totalorder %s188, %s189
      %p200 = scmp.eq.s32.totalorder %s23, 0
      %p201 = por %p199, %p200
      %p202 = scmp.ne.s32.totalorder %s188, %s189
      %p203 = scmp.eq.s32.totalorder %s24, 1
      %p204 = por %p202, %p203
      %p206 = scmp.ne.s32.totalorder %s189, %s205
      %p207 = scmp.eq.s32.totalorder %s24, 0
      %p208 = por %p206, %p207
      %p209 = scmp.le.s32.totalorder 1, %s18
      %p210 = scmp.lt.s32.totalorder %s18, 3
      %p211 = pnand %p209, %p210
      %p212 = pneg %p211
      // Predicated region
      $region9: #{tpu_custom_call.1} parent=5 // pred_check
        _
      $region10: #{tpu_custom_call.1} parent=5 // pred_check_branch
        %214 = sbr.rel (%p211) target = $region12
      $region11: #{tpu_custom_call.1} parent=5 // pred_region
        %s215 = ssub.s32 %s18, 1
        // Predicated region
        $region13: #{tpu_custom_call.1} parent=11 // pred_check
          %p216 = pneg %p93
        $region14: #{tpu_custom_call.1} parent=11 // pred_check_branch
          %218 = sbr.rel (%p216) target = $region16
        $region15: #{tpu_custom_call.1} parent=11 // pred_region
          %s219 = smul.u32 16, %s30
          %s221 = ssub.s32 2048, 2048
          %222 = vsyncadd [#allocation8], %s221
          %s223 = sadd.s32 %s29, %s219
          %s224 = smul.addr %s223, 128
          %s225 = scalar_lea.hbm %s1, %s224
          %s226 = sshll.u32 [#allocation7], 4
          %s227 = int_to_ptr.vmem [resolvable:$true] %s226
          %232 = dma.hbm_to_vmem [thread:$0]  %s225, 2048, %s227, [#allocation8], 128, 128, 8
        $region16: #{tpu_custom_call.1} parent=11 // pred_fallthru
          _
        // Predicated region
        $region17: #{tpu_custom_call.1} parent=11 // pred_check
          %p233 = pneg %p121
        $region18: #{tpu_custom_call.1} parent=11 // pred_check_branch
          %235 = sbr.rel (%p233) target = $region20
        $region19: #{tpu_custom_call.1} parent=11 // pred_region
          %s236 = smul.u32 16, %s30
          %s238 = ssub.s32 2048, 2048
          %239 = vsyncadd [#allocation8], %s238
          %s240 = sadd.s32 %s29, %s236
          %s241 = smul.addr %s240, 128
          %s242 = scalar_lea.hbm %s2, %s241
          %s243 = sshll.u32 [#allocation9], 4
          %s244 = int_to_ptr.vmem [resolvable:$true] %s243
          %249 = dma.hbm_to_vmem [thread:$0]  %s242, 2048, %s244, [#allocation8], 128, 128, 8
        $region20: #{tpu_custom_call.1} parent=11 // pred_fallthru
          _
        // Predicated region
        $region21: #{tpu_custom_call.1} parent=11 // pred_check
          %p250 = pneg %p147
        $region22: #{tpu_custom_call.1} parent=11 // pred_check_branch
          %252 = sbr.rel (%p250) target = $region24
        $region23: #{tpu_custom_call.1} parent=11 // pred_region
          %p253 = scmp.lt.s32.totalorder %s29, 0
          %s254 = scalar_select %p253, %s29, 0
          %s255 = scalar_lea.vmem %s3, %s254
        $region24: #{tpu_custom_call.1} parent=11 // pred_fallthru
          _
        // Predicated region
        $region25: #{tpu_custom_call.1} parent=11 // pred_check
          %p256 = pneg %p173
        $region26: #{tpu_custom_call.1} parent=11 // pred_check_branch
          %258 = sbr.rel (%p256) target = $region28
        $region27: #{tpu_custom_call.1} parent=11 // pred_region
          %p259 = scmp.lt.s32.totalorder %s29, 0
          %s260 = scalar_select %p259, %s29, 0
          %s261 = scalar_lea.vmem %s4, %s260
        $region28: #{tpu_custom_call.1} parent=11 // pred_fallthru
          _
      $region12: #{tpu_custom_call.1} parent=5 // pred_fallthru
        _
      %p262 = scmp.lt.s32.totalorder %s18, 2
      // Predicated region
      $region29: #{tpu_custom_call.1} parent=5 // pred_check
        %p263 = pneg %p262
      $region30: #{tpu_custom_call.1} parent=5 // pred_check_branch
        %265 = sbr.rel (%p263) target = $region32
      $region31: #{tpu_custom_call.1} parent=5 // pred_region
        // Predicated region
        $region33: #{tpu_custom_call.1} parent=31 // pred_check
          %p266 = pneg %p59
        $region34: #{tpu_custom_call.1} parent=31 // pred_check_branch
          %268 = sbr.rel (%p266) target = $region36
        $region35: #{tpu_custom_call.1} parent=31 // pred_region
          %s269 = sand.u32 %s49, 1
          %s270 = scalar_lea.sflag [#allocation5], %s269
          %s271 = sand.u32 %s49, 1
          %s272 = smul.addr %s271, 8
          %s273 = scalar_lea.vmem [#allocation4], %s272
          %s275 = ssub.s32 128, 128
          %276 = vsyncadd %s270, %s275
          %s277 = sadd.s32 %s27, %s25
          %s278 = smul.addr %s277, 128
          %s279 = scalar_lea.hbm %s0, %s278
          %s281 = sshll.u32 %s273, 4
          %s282 = int_to_ptr.vmem [resolvable:$true] %s281
          %284 = dma.hbm_to_vmem [thread:$0]  %s279, 128, %s282, %s270
        $region36: #{tpu_custom_call.1} parent=31 // pred_fallthru
          _
      $region32: #{tpu_custom_call.1} parent=5 // pred_fallthru
        _
      %p285 = scmp.le.s32.totalorder 1, %s18
      %p286 = scmp.lt.s32.totalorder %s18, 3
      %p287 = pnand %p285, %p286
      %p288 = pneg %p287
      // Predicated region
      $region37: #{tpu_custom_call.1} parent=5 // pred_check
        _
      $region38: #{tpu_custom_call.1} parent=5 // pred_check_branch
        %290 = sbr.rel (%p287) target = $region40
      $region39: #{tpu_custom_call.1} parent=5 // pred_region
        %s291 = ssub.s32 %s18, 1
        %s292 = sand.u32 %s52, 1
        %s293 = scalar_lea.sflag [#allocation5], %s292
        %s294 = sand.u32 %s52, 1
        %s295 = smul.addr %s294, 8
        %s296 = scalar_lea.vmem [#allocation4], %s295
        // Predicated region
        $region41: #{tpu_custom_call.1} parent=39 // pred_check
          %p297 = pneg %p65
        $region42: #{tpu_custom_call.1} parent=39 // pred_check_branch
          %299 = sbr.rel (%p297) target = $region44
        $region43: #{tpu_custom_call.1} parent=39 // pred_region
          %300 = dma.done %s293, 128
        $region44: #{tpu_custom_call.1} parent=39 // pred_fallthru
          _
        // Predicated region
        $region45: #{tpu_custom_call.1} parent=39 // pred_check
          %p301 = pneg %p93
        $region46: #{tpu_custom_call.1} parent=39 // pred_check_branch
          %303 = sbr.rel (%p301) target = $region48
        $region47: #{tpu_custom_call.1} parent=39 // pred_region
          %304 = dma.done [#allocation8], 2048
        $region48: #{tpu_custom_call.1} parent=39 // pred_fallthru
          _
        // Predicated region
        $region49: #{tpu_custom_call.1} parent=39 // pred_check
          %p305 = pneg %p121
        $region50: #{tpu_custom_call.1} parent=39 // pred_check_branch
          %307 = sbr.rel (%p305) target = $region52
        $region51: #{tpu_custom_call.1} parent=39 // pred_region
          %308 = dma.done [#allocation8], 2048
        $region52: #{tpu_custom_call.1} parent=39 // pred_fallthru
          _
        %s309 = sand.u32 %s52, 1
        %s310 = scalar_lea.sflag [#allocation5], %s309
        %s311 = sand.u32 %s52, 1
        %s312 = smul.addr %s311, 8
        %s313 = scalar_lea.vmem [#allocation4], %s312
        %p314 = pneg %p65
        %p315 = pneg %p62
        %p316 = pneg %p93
        %p317 = pneg %p90
        %p318 = pneg %p121
        %p319 = pneg %p118
        %p320 = scmp.lt.s32.totalorder %s29, 0
        %s321 = scalar_select %p320, %s29, 0
        %s322 = scalar_lea.vmem %s3, %s321
        %p323 = pneg %p147
        %p324 = pneg %p144
        %p325 = scmp.lt.s32.totalorder %s29, 0
        %s326 = scalar_select %p325, %s29, 0
        %s327 = scalar_lea.vmem %s4, %s326
        %p328 = pneg %p173
        %p329 = pneg %p170
        %p330 = pneg %p201
        %p331 = pneg %p198
        %s332 = sand.u32 %s188, 1
        %s333 = scalar_lea.sflag [#allocation6], %s332
        %s334 = sand.u32 %s188, 1
        %s335 = smul.addr %s334, 8
        %s336 = scalar_lea.vmem [#allocation10], %s335
        %s337 = smul.u32 16, %s30
        %s338 = smul.u32 16, %s30
        %p339 = scmp.lt.s32.totalorder %s29, 0
        %s340 = scalar_select %p339, %s29, 0
        %s341 = scalar_lea.vmem %s3, %s340
        %p342 = scmp.lt.s32.totalorder %s29, 0
        %s343 = scalar_select %p342, %s29, 0
        %s344 = scalar_lea.vmem %s4, %s343
        %v345 = vld [vmem:[%s296] sm:$0xff]
        %v346 = vld [vmem:[#allocation7] sm:$0xff]
        %v347 = vld [vmem:[#allocation7 + $0x8] sm:$0xff]
        %v348 = vld [vmem:[#allocation7 + $0x10] sm:$0xff]
        %v349 = vld [vmem:[#allocation7 + $0x18] sm:$0xff]
        %v350 = vld [vmem:[#allocation7 + $0x20] sm:$0xff]
        %v351 = vld [vmem:[#allocation7 + $0x28] sm:$0xff]
        %v352 = vld [vmem:[#allocation7 + $0x30] sm:$0xff]
        %v353 = vld [vmem:[#allocation7 + $0x38] sm:$0xff]
        %v354 = vld [vmem:[#allocation7 + $0x40] sm:$0xff]
        %v355 = vld [vmem:[#allocation7 + $0x48] sm:$0xff]
        %v356 = vld [vmem:[#allocation7 + $0x50] sm:$0xff]
        %v357 = vld [vmem:[#allocation7 + $0x58] sm:$0xff]
        %v358 = vld [vmem:[#allocation7 + $0x60] sm:$0xff]
        %v359 = vld [vmem:[#allocation7 + $0x68] sm:$0xff]
        %v360 = vld [vmem:[#allocation7 + $0x70] sm:$0xff]
        %v361 = vld [vmem:[#allocation7 + $0x78] sm:$0xff]
        %362 = vmatprep.subr.mxu0 0.0
        %363 = vmatpush1.msra.mxu0 %v346
        %364 = vmatprep.subr.mxu0 0.0
        %365 = vmatpush1.msra.mxu0 %v347
        %366 = vmatprep.subr.mxu0 0.0
        %367 = vmatpush1.msra.mxu0 %v348
        %368 = vmatprep.subr.mxu0 0.0
        %369 = vmatpush1.msra.mxu0 %v349
        %370 = vmatprep.subr.mxu0 0.0
        %371 = vmatpush1.msra.mxu0 %v350
        %372 = vmatprep.subr.mxu0 0.0
        %373 = vmatpush1.msra.mxu0 %v351
        %374 = vmatprep.subr.mxu0 0.0
        %375 = vmatpush1.msra.mxu0 %v352
        %376 = vmatprep.subr.mxu0 0.0
        %377 = vmatpush1.msra.mxu0 %v353
        %378 = vmatprep.subr.mxu0 0.0
        %379 = vmatpush1.msra.mxu0 %v354
        %380 = vmatprep.subr.mxu0 0.0
        %381 = vmatpush1.msra.mxu0 %v355
        %382 = vmatprep.subr.mxu0 0.0
        %383 = vmatpush1.msra.mxu0 %v356
        %384 = vmatprep.subr.mxu0 0.0
        %385 = vmatpush1.msra.mxu0 %v357
        %386 = vmatprep.subr.mxu0 0.0
        %387 = vmatpush1.msra.mxu0 %v358
        %388 = vmatprep.subr.mxu0 0.0
        %389 = vmatpush1.msra.mxu0 %v359
        %390 = vmatprep.subr.mxu0 0.0
        %391 = vmatpush1.msra.mxu0 %v360
        %392 = vmatprep.subr.mxu0 0.0
        %393 = vmatpush1.msra.mxu0 %v361
        %394 = vmatprep.subr.mxu0 0.0
        %395 = vmatpush1.msra.mxu0 0.0
        %396 = vmatprep.subr.mxu0 0.0
        %397 = vmatpush1.msra.mxu0 0.0
        %398 = vmatprep.subr.mxu0 0.0
        %399 = vmatpush1.msra.mxu0 0.0
        %400 = vmatprep.subr.mxu0 0.0
        %401 = vmatpush1.msra.mxu0 0.0
        %402 = vmatprep.subr.mxu0 0.0
        %403 = vmatpush1.msra.mxu0 0.0
        %404 = vmatprep.subr.mxu0 0.0
        %405 = vmatpush1.msra.mxu0 0.0
        %406 = vmatprep.subr.mxu0 0.0
        %407 = vmatpush1.msra.mxu0 0.0
        %408 = vmatprep.subr.mxu0 0.0
        %409 = vmatpush1.msra.mxu0 0.0
        %410 = vmatprep.subr.mxu0 0.0
        %411 = vmatpush1.msra.mxu0 0.0
        %412 = vmatprep.subr.mxu0 0.0
        %413 = vmatpush1.msra.mxu0 0.0
        %414 = vmatprep.subr.mxu0 0.0
        %415 = vmatpush1.msra.mxu0 0.0
        %416 = vmatprep.subr.mxu0 0.0
        %417 = vmatpush1.msra.mxu0 0.0
        %418 = vmatprep.subr.mxu0 0.0
        %419 = vmatpush1.msra.mxu0 0.0
        %420 = vmatprep.subr.mxu0 0.0
        %421 = vmatpush1.msra.mxu0 0.0
        %422 = vmatprep.subr.mxu0 0.0
        %423 = vmatpush1.msra.mxu0 0.0
        %424 = vmatprep.subr.mxu0 0.0
        %425 = vmatpush1.msra.mxu0 0.0
        %426 = vmatprep.mubr.f32.mxu0 0.0
        %427 = vmatmul.mubr.f32.gmra.mrb[0].mxu0 %v345
        %v428 = vpop.f32.mrb[0].mxu0
        %v429 = vadd.f32 0.0, %v428
        %v430 = vpop.f32.mrb[0].mxu0
        %431 = vdwg.mxu0
        %v432 = vld [vmem:[#allocation9] sm:$0xff]
        %v433 = vld [vmem:[#allocation9 + $0x8] sm:$0xff]
        %v434 = vld [vmem:[#allocation9 + $0x10] sm:$0xff]
        %v435 = vld [vmem:[#allocation9 + $0x18] sm:$0xff]
        %v436 = vld [vmem:[#allocation9 + $0x20] sm:$0xff]
        %v437 = vld [vmem:[#allocation9 + $0x28] sm:$0xff]
        %v438 = vld [vmem:[#allocation9 + $0x30] sm:$0xff]
        %v439 = vld [vmem:[#allocation9 + $0x38] sm:$0xff]
        %v440 = vld [vmem:[#allocation9 + $0x40] sm:$0xff]
        %v441 = vld [vmem:[#allocation9 + $0x48] sm:$0xff]
        %v442 = vld [vmem:[#allocation9 + $0x50] sm:$0xff]
        %v443 = vld [vmem:[#allocation9 + $0x58] sm:$0xff]
        %v444 = vld [vmem:[#allocation9 + $0x60] sm:$0xff]
        %v445 = vld [vmem:[#allocation9 + $0x68] sm:$0xff]
        %v446 = vld [vmem:[#allocation9 + $0x70] sm:$0xff]
        %v447 = vld [vmem:[#allocation9 + $0x78] sm:$0xff]
        %448 = vmatprep.subr.mxu0 0.0
        %449 = vmatpush1.msra.mxu0 %v432
        %450 = vmatprep.subr.mxu0 0.0
        %451 = vmatpush1.msra.mxu0 %v433
        %452 = vmatprep.subr.mxu0 0.0
        %453 = vmatpush1.msra.mxu0 %v434
        %454 = vmatprep.subr.mxu0 0.0
        %455 = vmatpush1.msra.mxu0 %v435
        %456 = vmatprep.subr.mxu0 0.0
        %457 = vmatpush1.msra.mxu0 %v436
        %458 = vmatprep.subr.mxu0 0.0
        %459 = vmatpush1.msra.mxu0 %v437
        %460 = vmatprep.subr.mxu0 0.0
        %461 = vmatpush1.msra.mxu0 %v438
        %462 = vmatprep.subr.mxu0 0.0
        %463 = vmatpush1.msra.mxu0 %v439
        %464 = vmatprep.subr.mxu0 0.0
        %465 = vmatpush1.msra.mxu0 %v440
        %466 = vmatprep.subr.mxu0 0.0
        %467 = vmatpush1.msra.mxu0 %v441
        %468 = vmatprep.subr.mxu0 0.0
        %469 = vmatpush1.msra.mxu0 %v442
        %470 = vmatprep.subr.mxu0 0.0
        %471 = vmatpush1.msra.mxu0 %v443
        %472 = vmatprep.subr.mxu0 0.0
        %473 = vmatpush1.msra.mxu0 %v444
        %474 = vmatprep.subr.mxu0 0.0
        %475 = vmatpush1.msra.mxu0 %v445
        %476 = vmatprep.subr.mxu0 0.0
        %477 = vmatpush1.msra.mxu0 %v446
        %478 = vmatprep.subr.mxu0 0.0
        %479 = vmatpush1.msra.mxu0 %v447
        %480 = vmatprep.subr.mxu0 0.0
        %481 = vmatpush1.msra.mxu0 0.0
        %482 = vmatprep.subr.mxu0 0.0
        %483 = vmatpush1.msra.mxu0 0.0
        %484 = vmatprep.subr.mxu0 0.0
        %485 = vmatpush1.msra.mxu0 0.0
        %486 = vmatprep.subr.mxu0 0.0
        %487 = vmatpush1.msra.mxu0 0.0
        %488 = vmatprep.subr.mxu0 0.0
        %489 = vmatpush1.msra.mxu0 0.0
        %490 = vmatprep.subr.mxu0 0.0
        %491 = vmatpush1.msra.mxu0 0.0
        %492 = vmatprep.subr.mxu0 0.0
        %493 = vmatpush1.msra.mxu0 0.0
        %494 = vmatprep.subr.mxu0 0.0
        %495 = vmatpush1.msra.mxu0 0.0
        %496 = vmatprep.subr.mxu0 0.0
        %497 = vmatpush1.msra.mxu0 0.0
        %498 = vmatprep.subr.mxu0 0.0
        %499 = vmatpush1.msra.mxu0 0.0
        %500 = vmatprep.subr.mxu0 0.0
        %501 = vmatpush1.msra.mxu0 0.0
        %502 = vmatprep.subr.mxu0 0.0
        %503 = vmatpush1.msra.mxu0 0.0
        %504 = vmatprep.subr.mxu0 0.0
        %505 = vmatpush1.msra.mxu0 0.0
        %506 = vmatprep.subr.mxu0 0.0
        %507 = vmatpush1.msra.mxu0 0.0
        %508 = vmatprep.subr.mxu0 0.0
        %509 = vmatpush1.msra.mxu0 0.0
        %510 = vmatprep.subr.mxu0 0.0
        %511 = vmatpush1.msra.mxu0 0.0
        %512 = vmatprep.mubr.f32.mxu0 0.0
        %513 = vmatmul.mubr.f32.gmra.mrb[0].mxu0 %v345
        %v514 = vpop.f32.mrb[0].mxu0
        %v515 = vadd.f32 0.0, %v514
        %v516 = vpop.f32.mrb[0].mxu0
        %517 = vdwg.mxu0
        %p518 = scmp.eq.s32.totalorder %s30, 0
        // Predicated region
        $region53: #{tpu_custom_call.1} parent=39 // pred_check
          %p519 = pneg %p518
        $region54: #{tpu_custom_call.1} parent=39 // pred_check_branch
          %521 = sbr.rel (%p519) target = $region56
        $region55: #{tpu_custom_call.1} parent=39 // pred_region
          %522 = vst [vmem:[#allocation2] sm:$0xff] %v429
          %523 = vst [vmem:[#allocation3] sm:$0xff] %v515
        $region56: #{tpu_custom_call.1} parent=39 // pred_fallthru
          _
        %p524 = scmp.ne.s32.totalorder %s30, 0
        // Predicated region
        $region57: #{tpu_custom_call.1} parent=39 // pred_check
          %p525 = pneg %p524
        $region58: #{tpu_custom_call.1} parent=39 // pred_check_branch
          %527 = sbr.rel (%p525) target = $region60
        $region59: #{tpu_custom_call.1} parent=39 // pred_region
          %v528 = vld [vmem:[#allocation2] sm:$0xff]
          %v529 = vadd.f32 %v528, %v429
          %530 = vst [vmem:[#allocation2] sm:$0xff] %v529
          %v531 = vld [vmem:[#allocation3] sm:$0xff]
          %v532 = vadd.f32 %v531, %v515
          %533 = vst [vmem:[#allocation3] sm:$0xff] %v532
        $region60: #{tpu_custom_call.1} parent=39 // pred_fallthru
          _
        // Predicated region
        $region61: #{tpu_custom_call.1} parent=39 // pred_check
          %p534 = pneg %p518
        $region62: #{tpu_custom_call.1} parent=39 // pred_check_branch
          %536 = sbr.rel (%p534) target = $region64
        $region63: #{tpu_custom_call.1} parent=39 // pred_region
          %v537 = vld [vmem:[#allocation2] sm:$0xff]
          %v538 = vld [vmem:[%s341] sm:$0x1]
          %v540 = vlaneseq
          %v541 = vshrl.u32 %v540, 7
          %v542 = vsub.s32 0, %v541
          %v543 = vrot.slane %v538, %v542
          %v545 = vadd.f32 %v537, %v543
          %v546 = vld [vmem:[#allocation3] sm:$0xff]
          %v547 = vld [vmem:[%s344] sm:$0x1]
          %v549 = vlaneseq
          %v550 = vshrl.u32 %v549, 7
          %v551 = vsub.s32 0, %v550
          %v552 = vrot.slane %v547, %v551
          %v554 = vadd.f32 %v546, %v552
          %v555 = vmul.f32 %v554, 0.5
          %v556 = vmul.f32 %v554, 0.70710677
          %v557 = verf.f32.pop %v556
          %v558 = vadd.f32 %v557, 1.0
          %v559 = vmul.f32 %v555, %v558
          %v560 = vmul.f32 %v545, %v559
          %561 = vst [vmem:[%s336] sm:$0xff] %v560
        $region64: #{tpu_custom_call.1} parent=39 // pred_fallthru
          _
        %s562 = sand.u32 %s188, 1
        %s563 = scalar_lea.sflag [#allocation6], %s562
        %s564 = sand.u32 %s188, 1
        %s565 = smul.addr %s564, 8
        %s566 = scalar_lea.vmem [#allocation10], %s565
        // Predicated region
        $region65: #{tpu_custom_call.1} parent=39 // pred_check
          %p567 = pneg %p198
        $region66: #{tpu_custom_call.1} parent=39 // pred_check_branch
          %569 = sbr.rel (%p567) target = $region68
        $region67: #{tpu_custom_call.1} parent=39 // pred_region
          %s571 = ssub.s32 128, 128
          %572 = vsyncadd %s563, %s571
          %s573 = sadd.s32 %s29, %s28
          %s574 = smul.addr %s573, 128
          %s575 = scalar_lea.hbm %s5, %s574
          %s577 = sshll.u32 %s566, 4
          %s578 = int_to_ptr.vmem [resolvable:$true] %s577
          %580 = dma.vmem_to_hbm [thread:$0]  %s578, 128, %s575, %s563
        $region68: #{tpu_custom_call.1} parent=39 // pred_fallthru
          _
      $region40: #{tpu_custom_call.1} parent=5 // pred_fallthru
        _
      %p581 = scmp.le.s32.totalorder 2, %s18
      // Predicated region
      $region69: #{tpu_custom_call.1} parent=5 // pred_check
        %p582 = pneg %p581
      $region70: #{tpu_custom_call.1} parent=5 // pred_check_branch
        %584 = sbr.rel (%p582) target = $region72
      $region71: #{tpu_custom_call.1} parent=5 // pred_region
        %s585 = ssub.s32 %s18, 2
        // Predicated region
        $region73: #{tpu_custom_call.1} parent=71 // pred_check
          %p586 = pneg %p204
        $region74: #{tpu_custom_call.1} parent=71 // pred_check_branch
          %588 = sbr.rel (%p586) target = $region76
        $region75: #{tpu_custom_call.1} parent=71 // pred_region
          %s589 = sand.u32 %s189, 1
          %s590 = scalar_lea.sflag [#allocation6], %s589
          %s591 = sand.u32 %s189, 1
          %s592 = smul.addr %s591, 8
          %s593 = scalar_lea.vmem [#allocation10], %s592
          %594 = dma.done %s590, 128
        $region76: #{tpu_custom_call.1} parent=71 // pred_fallthru
          _
      $region72: #{tpu_custom_call.1} parent=5 // pred_fallthru
        _
    $region6: #{tpu_custom_call.1} parent=1 // loop_footer
      %s22 = sadd.s32 1, %s18
    $region7: #{tpu_custom_call.1} parent=1 // loop_footer_branch
      %17 = sbr.rel target = $region3
    $region8: #{tpu_custom_call.1} parent=1 // loop_exit
      _
    %595 = vsyncpa [#allocation5], 1
    %s596 = scalar_lea.sflag [#allocation5], 1
    %597 = vsyncpa %s596, 1
    %598 = vsyncpa [#allocation8], 1
    %599 = vsyncpa [#allocation6], 1
    %s600 = scalar_lea.sflag [#allocation6], 1
    %601 = vsyncpa %s600, 1

</llo_original>
